<compile_context>
chip_gen: v5e
topology: v5e:2x2
jax: 0.10.0
libtpu: 0.0.40
codegen_flags: <defaults>
</compile_context>

<pallas_src>
import functools

import jax
import jax.numpy as jnp
from jax import lax
from jax.experimental import pallas as pl
from jax.experimental.pallas import tpu as pltpu


def _round_up(x, m):
    return ((x + m - 1) // m) * m


def _critic_kernel(x_ref, w1_ref, b1_ref, w2_ref, b2_ref, wv_ref, bv_ref, vT_ref,
                   *, compute_dtype):
    """One batch tile.

    x_ref  : [tile_b, state_dim] float32  (natural PyTorch layout, no wrapper transpose)
    w*_ref : PyTorch layout [out_features, in_features], compute_dtype
    b*_ref : [out_features, 1] float32
    vT_ref : [1, tile_b] float32          (lane-dense output; batch on lanes)
    """
    # On-chip cast only (VPU); x keeps its single f32 HBM read.
    x = x_ref[...].astype(compute_dtype)

    # fc1 + tanh :  h1 = tanh(W1 @ x^T + b1)  -> [net_width, tile_b]
    # dot_general contracts the in-feature dims, so the transpose happens on the
    # MXU feed path instead of as an extra wrapper-side HBM round trip.
    a1 = lax.dot_general(
        w1_ref[...], x,
        dimension_numbers=(((1,), (1,)), ((), ())),
        preferred_element_type=jnp.float32,
    ) + b1_ref[...]
    h1 = jnp.tanh(a1.astype(compute_dtype))          # bf16 tanh on v6e/v7x EUP

    # fc2 + tanh :  h2 = tanh(W2 @ h1 + b2)   -> [net_width, tile_b]
    a2 = jnp.dot(w2_ref[...], h1, preferred_element_type=jnp.float32) + b2_ref[...]
    h2 = jnp.tanh(a2.astype(compute_dtype))

    # value head :  v^T = Wv @ h2 + bv        -> [1, tile_b]
    v = jnp.dot(wv_ref[...], h2, preferred_element_type=jnp.float32) + bv_ref[...]
    vT_ref[...] = v.astype(vT_ref.dtype)


def critic_forward(x, params, *, tile_b_max=16384, compute_dtype=jnp.bfloat16):
    """x: [B, state_dim] float32.  params: PyTorch-layout weights/biases.

    Returns value estimates of shape [B, 1] (float32).
    """
    assert tile_b_max % 128 == 0 and tile_b_max >= 128
    B, state_dim = x.shape
    net_width = params["W1"].shape[0]

    # ---- batch tile choice (no wrapper-side transpose / pad / cast of x) -----
    # Multi-step grids need the tile to be a multiple of 128 (lane width of the
    # [1, B] output block); a single-step grid may use tile_b == B for any B.
    # For large batches force >= 2 grid steps so the "parallel" batch axis can
    # be sharded across both v7x TensorCores (harmless on v5e/v6e).
    if B <= 128:
        tile_b = B
    else:
        tile_b = min(tile_b_max, _round_up(pl.cdiv(B, 2), 128))
    grid = (pl.cdiv(B, tile_b),)   # partial last tile handled by Pallas (OOB
                                   # columns never mix with valid ones and the
                                   # OOB part of the output store is masked).

    # ---- params: weights cast once (tiny); biases as [out, 1] f32 columns ----
    w1 = params["W1"].astype(compute_dtype)                      # [net_width, state_dim]
    w2 = params["W2"].astype(compute_dtype)                      # [net_width, net_width]
    wv = params["Wv"].astype(compute_dtype)                      # [1, net_width]
    b1 = params["b1"].reshape(net_width, 1).astype(jnp.float32)
    b2 = params["b2"].reshape(net_width, 1).astype(jnp.float32)
    bv = params["bv"].reshape(1, 1).astype(jnp.float32)

    # ---- VMEM budget: double-buffered x/out blocks + resident weights + h1/h2,
    # clamped to the actual device VMEM (64 MiB on v7x, 128 MiB on v5e/v6e). ---
    w_item = jnp.dtype(compute_dtype).itemsize
    x_blk = tile_b * state_dim * 4                      # x stays f32 in HBM
    out_blk = tile_b * 4
    weight_bytes = (net_width * state_dim + net_width * net_width + net_width) * w_item
    bias_bytes = (2 * net_width + 1) * 4
    interm_bytes = 2 * net_width * tile_b * 4           # h1 / h2 temporaries (f32)
    need = 2 * (x_blk + out_blk) + 2 * (weight_bytes + bias_bytes) + 2 * interm_bytes
    try:
        phys_vmem = pltpu.get_tpu_info().vmem_capacity_bytes
    except Exception:
        phys_vmem = 64 << 20                            # conservative (v7x) fallback
    cap = int(phys_vmem * 3 // 4)                       # leave compiler headroom
    vmem_limit = int(min(max(2 * need, 16 << 20), cap))

    kernel = functools.partial(_critic_kernel, compute_dtype=compute_dtype)

    vT = pl.pallas_call(
        kernel,
        out_shape=jax.ShapeDtypeStruct((1, B), jnp.float32),
        grid=grid,
        in_specs=[
            # x streamed over batch tiles in its natural layout (auto double-buffered).
            pl.BlockSpec((tile_b, state_dim), lambda i: (i, 0)),
            # Weights / biases: constant index_map -> fetched once, VMEM-resident.
            pl.BlockSpec(w1.shape, lambda i: (0, 0)),
            pl.BlockSpec(b1.shape, lambda i: (0, 0)),
            pl.BlockSpec(w2.shape, lambda i: (0, 0)),
            pl.BlockSpec(b2.shape, lambda i: (0, 0)),
            pl.BlockSpec(wv.shape, lambda i: (0, 0)),
            pl.BlockSpec(bv.shape, lambda i: (0, 0)),
        ],
        out_specs=pl.BlockSpec((1, tile_b), lambda i: (0, i)),
        compiler_params=pltpu.CompilerParams(
            dimension_semantics=("parallel",),   # megacore-shard batch axis on v7x
            vmem_limit_bytes=vmem_limit,
        ),
    )(x, w1, b1, w2, b2, wv, bv)

    # (1, B) -> (B, 1): pure reshape of B*4 bytes, no data transpose.
    return vT.reshape(B, 1)


def init_critic_params(key, state_dim, net_width):
    """PyTorch nn.Linear default init: U(-1/sqrt(fan_in), 1/sqrt(fan_in)),
    weights stored in PyTorch layout [out_features, in_features]."""
    k1, k2, k3, k4, k5, k6 = jax.random.split(key, 6)

    def lin(kw, kb, fan_in, fan_out):
        bound = 1.0 / float(fan_in) ** 0.5
        W = jax.random.uniform(kw, (fan_out, fan_in), jnp.float32, -bound, bound)
        b = jax.random.uniform(kb, (fan_out,), jnp.float32, -bound, bound)
        return W, b

    W1, b1 = lin(k1, k2, state_dim, net_width)
    W2, b2 = lin(k3, k4, net_width, net_width)
    Wv, bv = lin(k5, k6, net_width, 1)
    return {"W1": W1, "b1": b1, "W2": W2, "b2": b2, "Wv": Wv, "bv": bv}


def critic_reference(x, p):
    h1 = jnp.tanh(x @ p["W1"].T + p["b1"])
    h2 = jnp.tanh(h1 @ p["W2"].T + p["b2"])
    return h2 @ p["Wv"].T + p["bv"]


if __name__ == "__main__":
    key = jax.random.PRNGKey(0)
    k_param, k_x, k_x2 = jax.random.split(key, 3)

    batch = 8
    state_dim = 16
    net_width = 32

    params = init_critic_params(k_param, state_dim, net_width)

    # Tiny batch (single grid step, tile_b == B), f32 path, tight tolerance.
    x = jax.random.normal(k_x, (batch, state_dim), jnp.float32)
    v = jax.block_until_ready(critic_forward(x, params, compute_dtype=jnp.float32))
    v_ref = critic_reference(x, params)
    assert v.shape == (batch, 1)
    assert jnp.allclose(v, v_ref, atol=1e-5, rtol=1e-5)

    # Multi-step grid with a partial last tile (B=300 -> tile_b=256, grid=2), f32.
    x_big = jax.random.normal(k_x2, (300, state_dim), jnp.float32)
    v_big = jax.block_until_ready(critic_forward(x_big, params, compute_dtype=jnp.float32))
    assert v_big.shape == (300, 1)
    assert jnp.allclose(v_big, critic_reference(x_big, params), atol=1e-5, rtol=1e-5)

    # Small explicit tile (3 grid steps) to exercise the streaming path, f32.
    v_tiles = jax.block_until_ready(
        critic_forward(x_big, params, tile_b_max=128, compute_dtype=jnp.float32))
    assert jnp.allclose(v_tiles, critic_reference(x_big, params), atol=1e-5, rtol=1e-5)

    # Default bf16 compute path: x stays f32 in HBM, cast on-chip; f32 matmul
    # accumulation; bf16 tanh.  Looser tolerance from bf16 quantization.
    v_bf16 = jax.block_until_ready(critic_forward(x_big, params))
    assert v_bf16.shape == (300, 1)
    assert jnp.allclose(v_bf16, critic_reference(x_big, params), atol=1e-1, rtol=1e-1)

    print("KERNEL_OK")
</pallas_src>

<mosaic_0001>
module attributes {stable_mosaic.version = 11 : i64} {
  func.func @_critic_kernel(%arg0: i32, %arg1: memref<8x16xf32, #tpu.memory_space<vmem>>, %arg2: memref<32x16xf32, #tpu.memory_space<vmem>>, %arg3: memref<32x1xf32, #tpu.memory_space<vmem>>, %arg4: memref<32x32xf32, #tpu.memory_space<vmem>>, %arg5: memref<32x1xf32, #tpu.memory_space<vmem>>, %arg6: memref<1x32xf32, #tpu.memory_space<vmem>>, %arg7: memref<1x1xf32, #tpu.memory_space<vmem>>, %arg8: memref<1x8xf32, #tpu.memory_space<vmem>>) attributes {dimension_semantics = [#tpu.dimension_semantics<parallel>], iteration_bounds = array<i64: 1>, scalar_prefetch = 0 : i64, scratch_operands = 0 : i64, tpu.core_type = #tpu.core_type<tc>, window_params = [{transform_indices = @transform_0, window_bounds = array<i64: 8, 16>}, {pipeline_mode = #tpu.pipeline_mode<synchronous>, transform_indices = @transform_1, window_bounds = array<i64: 32, 16>}, {pipeline_mode = #tpu.pipeline_mode<synchronous>, transform_indices = @transform_2, window_bounds = array<i64: 32, 1>}, {pipeline_mode = #tpu.pipeline_mode<synchronous>, transform_indices = @transform_3, window_bounds = array<i64: 32, 32>}, {pipeline_mode = #tpu.pipeline_mode<synchronous>, transform_indices = @transform_4, window_bounds = array<i64: 32, 1>}, {pipeline_mode = #tpu.pipeline_mode<synchronous>, transform_indices = @transform_5, window_bounds = array<i64: 1, 32>}, {pipeline_mode = #tpu.pipeline_mode<synchronous>, transform_indices = @transform_6, window_bounds = array<i64: 1, 1>}, {transform_indices = @transform_7, window_bounds = array<i64: 1, 8>}]} {
    %c0 = arith.constant 0 : index
    %c0_0 = arith.constant 0 : index
    %0 = vector.load %arg1[%c0, %c0_0] : memref<8x16xf32, #tpu.memory_space<vmem>>, vector<8x16xf32>
    %c0_1 = arith.constant 0 : index
    %c0_2 = arith.constant 0 : index
    %1 = vector.load %arg2[%c0_1, %c0_2] : memref<32x16xf32, #tpu.memory_space<vmem>>, vector<32x16xf32>
    %cst = arith.constant dense<0.000000e+00> : vector<32x8xf32>
    %2 = tpu.matmul %1, %0, %cst {dimension_numbers = #tpu.dot_dimension_numbers<[1], [1], [0], [0], [0, 0, 1, 0], [], []>} : vector<32x16xf32>, vector<8x16xf32>, vector<32x8xf32> -> vector<32x8xf32>
    %c0_3 = arith.constant 0 : index
    %c0_4 = arith.constant 0 : index
    %3 = vector.load %arg3[%c0_3, %c0_4] : memref<32x1xf32, #tpu.memory_space<vmem>>, vector<32x1xf32>
    %4 = vector.broadcast %3 : vector<32x1xf32> to vector<32x8xf32>
    %5 = arith.addf %2, %4 : vector<32x8xf32>
    %6 = math.tanh %5 : vector<32x8xf32>
    %c0_5 = arith.constant 0 : index
    %c0_6 = arith.constant 0 : index
    %7 = vector.load %arg4[%c0_5, %c0_6] : memref<32x32xf32, #tpu.memory_space<vmem>>, vector<32x32xf32>
    %cst_7 = arith.constant dense<0.000000e+00> : vector<32x8xf32>
    %8 = tpu.matmul %7, %6, %cst_7 {dimension_numbers = #tpu.dot_dimension_numbers<[1], [0], [0], [1], [0, 0, 1, 1], [], []>} : vector<32x32xf32>, vector<32x8xf32>, vector<32x8xf32> -> vector<32x8xf32>
    %c0_8 = arith.constant 0 : index
    %c0_9 = arith.constant 0 : index
    %9 = vector.load %arg5[%c0_8, %c0_9] : memref<32x1xf32, #tpu.memory_space<vmem>>, vector<32x1xf32>
    %10 = vector.broadcast %9 : vector<32x1xf32> to vector<32x8xf32>
    %11 = arith.addf %8, %10 : vector<32x8xf32>
    %12 = math.tanh %11 : vector<32x8xf32>
    %c0_10 = arith.constant 0 : index
    %c0_11 = arith.constant 0 : index
    %13 = vector.load %arg6[%c0_10, %c0_11] : memref<1x32xf32, #tpu.memory_space<vmem>>, vector<1x32xf32>
    %cst_12 = arith.constant dense<0.000000e+00> : vector<1x8xf32>
    %14 = tpu.matmul %13, %12, %cst_12 {dimension_numbers = #tpu.dot_dimension_numbers<[1], [0], [0], [1], [0, 0, 1, 1], [], []>} : vector<1x32xf32>, vector<32x8xf32>, vector<1x8xf32> -> vector<1x8xf32>
    %c0_13 = arith.constant 0 : index
    %c0_14 = arith.constant 0 : index
    %15 = vector.load %arg7[%c0_13, %c0_14] : memref<1x1xf32, #tpu.memory_space<vmem>>, vector<1x1xf32>
    %16 = vector.broadcast %15 : vector<1x1xf32> to vector<1x8xf32>
    %17 = arith.addf %14, %16 : vector<1x8xf32>
    %c0_15 = arith.constant 0 : index
    %c0_16 = arith.constant 0 : index
    %18 = vector.load %arg8[%c0_15, %c0_16] : memref<1x8xf32, #tpu.memory_space<vmem>>, vector<1x8xf32>
    tpu.vector_store %arg8[%c0_15, %c0_16], %17 {strides = array<i32>} : memref<1x8xf32, #tpu.memory_space<vmem>>, vector<1x8xf32>,
    return
  }
  func.func @transform_0(%arg0: i32) -> (i32, i32) {
    %c0_i32 = arith.constant 0 : i32
    %c0_i32_0 = arith.constant 0 : i32
    return %arg0, %c0_i32 : i32, i32
  }
  func.func @transform_1(%arg0: i32) -> (i32, i32) {
    %c0_i32 = arith.constant 0 : i32
    %c0_i32_0 = arith.constant 0 : i32
    %c0_i32_1 = arith.constant 0 : i32
    return %c0_i32, %c0_i32_0 : i32, i32
  }
  func.func @transform_2(%arg0: i32) -> (i32, i32) {
    %c0_i32 = arith.constant 0 : i32
    %c0_i32_0 = arith.constant 0 : i32
    %c0_i32_1 = arith.constant 0 : i32
    return %c0_i32, %c0_i32_0 : i32, i32
  }
  func.func @transform_3(%arg0: i32) -> (i32, i32) {
    %c0_i32 = arith.constant 0 : i32
    %c0_i32_0 = arith.constant 0 : i32
    %c0_i32_1 = arith.constant 0 : i32
    return %c0_i32, %c0_i32_0 : i32, i32
  }
  func.func @transform_4(%arg0: i32) -> (i32, i32) {
    %c0_i32 = arith.constant 0 : i32
    %c0_i32_0 = arith.constant 0 : i32
    %c0_i32_1 = arith.constant 0 : i32
    return %c0_i32, %c0_i32_0 : i32, i32
  }
  func.func @transform_5(%arg0: i32) -> (i32, i32) {
    %c0_i32 = arith.constant 0 : i32
    %c0_i32_0 = arith.constant 0 : i32
    %c0_i32_1 = arith.constant 0 : i32
    return %c0_i32, %c0_i32_0 : i32, i32
  }
  func.func @transform_6(%arg0: i32) -> (i32, i32) {
    %c0_i32 = arith.constant 0 : i32
    %c0_i32_0 = arith.constant 0 : i32
    %c0_i32_1 = arith.constant 0 : i32
    return %c0_i32, %c0_i32_0 : i32, i32
  }
  func.func @transform_7(%arg0: i32) -> (i32, i32) {
    %c0_i32 = arith.constant 0 : i32
    %c0_i32_0 = arith.constant 0 : i32
    return %c0_i32, %arg0 : i32, i32
  }
}

</mosaic_0001>

<llo_original>
// kernel: tpu_custom_call.1
$region0: #{tpu_custom_call.1}
  #allocation0 [shape = 'u32[]', space=smem, size = 0x4, offset = 0x4, fixed_abs, tag = 'smem constant byte address 0x4 - core index']
  #allocation1 [shape = 'u32[72,128]{1,0:T(1,128)}', space=vmem, size = 0x9000, scoped, tag = 'internal scratch']
  #allocation2 [shape = 'f32[1,1]{1,0:T(1,128)S(1)}', space=vmem, size = 0x200, scoped, tag = 'scoped memory for tpu_custom_call.1']
  %s0 = inlined_call_operand.vmem [shape: f32[8,16], index: 0, kind: input, shape index: {}]
  %s1 = inlined_call_operand.vmem [shape: f32[32,16], index: 1, kind: input, shape index: {}]
  %s2 = inlined_call_operand.vmem [shape: f32[32,1], index: 2, kind: input, shape index: {}]
  %s3 = inlined_call_operand.vmem [shape: f32[32,32], index: 3, kind: input, shape index: {}]
  %s4 = inlined_call_operand.vmem [shape: f32[32,1], index: 4, kind: input, shape index: {}]
  %s5 = inlined_call_operand.vmem [shape: f32[1,32], index: 5, kind: input, shape index: {}]
  %s6 = inlined_call_operand.<no memory space> [shape: f32[1,1], index: 6, kind: input, shape index: {}]
  %s7 = inlined_call_operand.hbm [shape: f32[1,8], index: 7, kind: output, shape index: {}]
  %s8 = sld [smem:[#allocation0]]
  $region38: #{tpu_custom_call.1} parent=0
    _
  %s10 = ssub.s32 1, %s8
  %s11 = scalar_select 0, %s10, %s8
  %v12 = vstv %s6
  %13 = vst [vmem:[#allocation2] sm:$0x1] %v12
  $region1: #{tpu_custom_call.1} parent=0
    #allocation3 [shape = 'u8[512]{0}', space=vmem, size = 0x400, scoped, tag = 'output window, operand 0, single buffered']
    #allocation4 [shape = 's32[1]{0}', space=sflag, size = 0x4, scoped, tag = 'scoped memory for tpu_custom_call.1']
    %14 = vsyncpa [#allocation4], 0
    // Predicated region
    $region2: #{tpu_custom_call.1} parent=1 // pred_check
      _
    $region3: #{tpu_custom_call.1} parent=1 // pred_check_branch
      %16 = sbr.rel (0) target = $region5
    $region4: #{tpu_custom_call.1} parent=1 // pred_region
      _
    $region5: #{tpu_custom_call.1} parent=1 // pred_fallthru
      _
    // Predicated region
    $region6: #{tpu_custom_call.1} parent=1 // pred_check
      _
    $region7: #{tpu_custom_call.1} parent=1 // pred_check_branch
      %18 = sbr.rel (0) target = $region9
    $region8: #{tpu_custom_call.1} parent=1 // pred_region
      _
    $region9: #{tpu_custom_call.1} parent=1 // pred_fallthru
      _
    // Predicated region
    $region10: #{tpu_custom_call.1} parent=1 // pred_check
      _
    $region11: #{tpu_custom_call.1} parent=1 // pred_check_branch
      %20 = sbr.rel (0) target = $region13
    $region12: #{tpu_custom_call.1} parent=1 // pred_region
      _
    $region13: #{tpu_custom_call.1} parent=1 // pred_fallthru
      _
    // Predicated region
    $region14: #{tpu_custom_call.1} parent=1 // pred_check
      _
    $region15: #{tpu_custom_call.1} parent=1 // pred_check_branch
      %22 = sbr.rel (0) target = $region17
    $region16: #{tpu_custom_call.1} parent=1 // pred_region
      _
    $region17: #{tpu_custom_call.1} parent=1 // pred_fallthru
      _
    // Predicated region
    $region18: #{tpu_custom_call.1} parent=1 // pred_check
      _
    $region19: #{tpu_custom_call.1} parent=1 // pred_check_branch
      %24 = sbr.rel (0) target = $region21
    $region20: #{tpu_custom_call.1} parent=1 // pred_region
      _
    $region21: #{tpu_custom_call.1} parent=1 // pred_fallthru
      _
    // Predicated region
    $region22: #{tpu_custom_call.1} parent=1 // pred_check
      _
    $region23: #{tpu_custom_call.1} parent=1 // pred_check_branch
      %26 = sbr.rel (0) target = $region25
    $region24: #{tpu_custom_call.1} parent=1 // pred_region
      _
    $region25: #{tpu_custom_call.1} parent=1 // pred_fallthru
      _
    // Predicated region
    $region26: #{tpu_custom_call.1} parent=1 // pred_check
      _
    $region27: #{tpu_custom_call.1} parent=1 // pred_check_branch
      %28 = sbr.rel (0) target = $region29
    $region28: #{tpu_custom_call.1} parent=1 // pred_region
      _
    $region29: #{tpu_custom_call.1} parent=1 // pred_fallthru
      _
    %v29 = vld [vmem:[%s0] sm:$0xff]
    %v30 = vld [vmem:[%s1] sm:$0xff]
    %v31 = vld [vmem:[%s1 + $0x8] sm:$0xff]
    %v32 = vld [vmem:[%s1 + $0x10] sm:$0xff]
    %v33 = vld [vmem:[%s1 + $0x18] sm:$0xff]
    %v34 = vld [vmem:[%s2] sm:$0xff]
    %v35 = vld [vmem:[%s2 + $0x8] sm:$0xff]
    %v36 = vld [vmem:[%s2 + $0x10] sm:$0xff]
    %v37 = vld [vmem:[%s2 + $0x18] sm:$0xff]
    %39 = vset.pattern.permute.xlu0 0
    %40 = vperm.xlu0 %39, %v34
    %v41 = vpop.permute.xlu0 %40
    %44 = vset.pattern.permute.xlu0 0
    %45 = vperm.xlu0 %44, %v35
    %v46 = vpop.permute.xlu0 %45
    %49 = vset.pattern.permute.xlu0 0
    %50 = vperm.xlu0 %49, %v36
    %v51 = vpop.permute.xlu0 %50
    %54 = vset.pattern.permute.xlu0 0
    %55 = vperm.xlu0 %54, %v37
    %v56 = vpop.permute.xlu0 %55
    %vm58 = vcmask 130048
    %v60 = vsel %vm58, %v30, 0
    %v63 = vsel %vm58, %v31, 0
    %v66 = vsel %vm58, %v32, 0
    %v69 = vsel %vm58, %v33, 0
    %v72 = vsel %vm58, %v29, 0
    %74 = vmatpush.xpose.msra.mxu0 0.0
    %75 = vmatpush.xpose.msra.mxu0 0.0
    %76 = vmatpush.xpose.msra.mxu0 0.0
    %77 = vmatpush.xpose.msra.mxu0 0.0
    %78 = vmatpush.xpose.msra.mxu0 0.0
    %79 = vmatpush.xpose.msra.mxu0 0.0
    %80 = vmatpush.xpose.msra.mxu0 0.0
    %81 = vmatpush.xpose.msra.mxu0 0.0
    %82 = vmatpush.xpose.msra.mxu0 0.0
    %83 = vmatpush.xpose.msra.mxu0 0.0
    %84 = vmatpush.xpose.msra.mxu0 0.0
    %85 = vmatpush.xpose.msra.mxu0 0.0
    %86 = vmatpush.xpose.msra.mxu0 0.0
    %87 = vmatpush.xpose.msra.mxu0 0.0
    %88 = vmatpush.xpose.msra.mxu0 0.0
    %89 = vmatpush.xpose.msra.mxu0 %v72
    %90 = vmatmul.f32.gmra.mxu0 %v60
    %v91 = vpop.f32.mrf.mxu0
    %v92 = vadd.f32 %v41, %v91
    %93 = vmatmul.f32.gmra.mxu0 %v63
    %v94 = vpop.f32.mrf.mxu0
    %v95 = vadd.f32 %v46, %v94
    %96 = vmatmul.f32.gmra.mxu0 %v66
    %v97 = vpop.f32.mrf.mxu0
    %v98 = vadd.f32 %v51, %v97
    %99 = vmatmul.f32.gmra.mxu0 %v69
    %v100 = vpop.f32.mrf.mxu0
    %v101 = vadd.f32 %v56, %v100
    %102 = vdwg.mxu0
    %v103 = vtanh.pop %v92
    %v104 = vtanh.pop %v95
    %v105 = vtanh.pop %v98
    %v106 = vtanh.pop %v101
    %v107 = vld [vmem:[%s3] sm:$0xff]
    %v108 = vld [vmem:[%s3 + $0x8] sm:$0xff]
    %v109 = vld [vmem:[%s3 + $0x10] sm:$0xff]
    %v110 = vld [vmem:[%s3 + $0x18] sm:$0xff]
    %v111 = vld [vmem:[%s4] sm:$0xff]
    %v112 = vld [vmem:[%s4 + $0x8] sm:$0xff]
    %v113 = vld [vmem:[%s4 + $0x10] sm:$0xff]
    %v114 = vld [vmem:[%s4 + $0x18] sm:$0xff]
    %116 = vset.pattern.permute.xlu0 0
    %117 = vperm.xlu0 %116, %v111
    %v118 = vpop.permute.xlu0 %117
    %121 = vset.pattern.permute.xlu0 0
    %122 = vperm.xlu0 %121, %v112
    %v123 = vpop.permute.xlu0 %122
    %126 = vset.pattern.permute.xlu0 0
    %127 = vperm.xlu0 %126, %v113
    %v128 = vpop.permute.xlu0 %127
    %131 = vset.pattern.permute.xlu0 0
    %132 = vperm.xlu0 %131, %v114
    %v133 = vpop.permute.xlu0 %132
    %vm135 = vcmask 261120
    %v137 = vsel %vm135, %v107, 0
    %v140 = vsel %vm135, %v108, 0
    %v143 = vsel %vm135, %v109, 0
    %v146 = vsel %vm135, %v110, 0
    %148 = vmatpush.msra.mxu0 0.0
    %149 = vmatpush.msra.mxu0 0.0
    %150 = vmatpush.msra.mxu0 0.0
    %151 = vmatpush.msra.mxu0 0.0
    %152 = vmatpush.msra.mxu0 0.0
    %153 = vmatpush.msra.mxu0 0.0
    %154 = vmatpush.msra.mxu0 0.0
    %155 = vmatpush.msra.mxu0 0.0
    %156 = vmatpush.msra.mxu0 0.0
    %157 = vmatpush.msra.mxu0 0.0
    %158 = vmatpush.msra.mxu0 0.0
    %159 = vmatpush.msra.mxu0 0.0
    %160 = vmatpush.msra.mxu0 %v106
    %161 = vmatpush.msra.mxu0 %v105
    %162 = vmatpush.msra.mxu0 %v104
    %163 = vmatpush.msra.mxu0 %v103
    %164 = vmatmul.f32.gmra.mxu0 %v137
    %v165 = vpop.f32.mrf.mxu0
    %v166 = vadd.f32 %v118, %v165
    %167 = vmatmul.f32.gmra.mxu0 %v140
    %v168 = vpop.f32.mrf.mxu0
    %v169 = vadd.f32 %v123, %v168
    %170 = vmatmul.f32.gmra.mxu0 %v143
    %v171 = vpop.f32.mrf.mxu0
    %v172 = vadd.f32 %v128, %v171
    %173 = vmatmul.f32.gmra.mxu0 %v146
    %v174 = vpop.f32.mrf.mxu0
    %v175 = vadd.f32 %v133, %v174
    %176 = vdwg.mxu0
    %v177 = vtanh.pop %v166
    %v178 = vtanh.pop %v169
    %v179 = vtanh.pop %v172
    %v180 = vtanh.pop %v175
    %v181 = vld [vmem:[%s5] sm:$0x1]
    %v182 = vld [vmem:[#allocation2] sm:$0x1]
    %184 = vset.pattern.permute.xlu0 0
    %185 = vperm.xlu0 %184, %v182
    %v186 = vpop.permute.xlu0 %185
    %v188 = vperm.slane %v186, 0
    %v190 = vsel %vm135, %v181, 0
    %192 = vmatpush.msra.mxu0 0.0
    %193 = vmatpush.msra.mxu0 0.0
    %194 = vmatpush.msra.mxu0 0.0
    %195 = vmatpush.msra.mxu0 0.0
    %196 = vmatpush.msra.mxu0 0.0
    %197 = vmatpush.msra.mxu0 0.0
    %198 = vmatpush.msra.mxu0 0.0
    %199 = vmatpush.msra.mxu0 0.0
    %200 = vmatpush.msra.mxu0 0.0
    %201 = vmatpush.msra.mxu0 0.0
    %202 = vmatpush.msra.mxu0 0.0
    %203 = vmatpush.msra.mxu0 0.0
    %204 = vmatpush.msra.mxu0 %v180
    %205 = vmatpush.msra.mxu0 %v179
    %206 = vmatpush.msra.mxu0 %v178
    %207 = vmatpush.msra.mxu0 %v177
    %208 = vmatmul.f32.gmra.mxu0 %v190
    %v209 = vpop.f32.mrf.mxu0
    %v210 = vadd.f32 %v188, %v209
    %211 = vdwg.mxu0
    %vm212 = vcmask 57344
    %213 = vst.msk [vmem:[#allocation3] sm:$0x1] %vm212, %v210
    // Predicated region
    $region30: #{tpu_custom_call.1} parent=1 // pred_check
      _
    $region31: #{tpu_custom_call.1} parent=1 // pred_check_branch
      %215 = sbr.rel (0) target = $region33
    $region32: #{tpu_custom_call.1} parent=1 // pred_region
      %217 = vsyncadd [#allocation4], 0
      %s219 = sshll.u32 [#allocation3], 4
      %s220 = int_to_ptr.vmem [resolvable:$true] %s219
      %s221 = sshll.u32 %s7, 4
      %s222 = int_to_ptr.hbm [resolvable:$true] %s221
      %224 = dma.vmem_to_hbm [thread:$0]  %s220, 16, %s222, [#allocation4]
    $region33: #{tpu_custom_call.1} parent=1 // pred_fallthru
      _
    // Predicated region
    $region34: #{tpu_custom_call.1} parent=1 // pred_check
      _
    $region35: #{tpu_custom_call.1} parent=1 // pred_check_branch
      %226 = sbr.rel (0) target = $region37
    $region36: #{tpu_custom_call.1} parent=1 // pred_region
      %228 = dma.done [#allocation4], 16
    $region37: #{tpu_custom_call.1} parent=1 // pred_fallthru
      _
    %229 = vsyncpa [#allocation4], 1

</llo_original>
